<compile_context>
chip_gen: v6e
topology: v6e:2x2x1
jax: 0.10.0
libtpu: 0.0.40
codegen_flags: <defaults>
</compile_context>

<pallas_src>
from functools import partial

import jax
import jax.numpy as jnp
from jax.experimental import pallas as pl
from jax.experimental.pallas import tpu as pltpu


def _leaky_relu(x, slope=0.2):
    # max(x, slope*x) == LeakyReLU for slope < 1 (one vmul+vmax, no cmp/select).
    return jnp.maximum(x, slope * x)


def _pick_batch_tile(B):
    """Largest sublane-aligned batch tile; prefer >=2 grid steps (v7x megacore)."""
    if B <= 8:
        return B
    tb = next(t for t in (1024, 512, 256, 128, 64, 32, 16, 8) if t <= B)
    while tb > 8 and pl.cdiv(B, tb) < 2:
        tb //= 2
    return tb


def mcm_kernel(x_ref, wg1_ref, wg2_ref, we1_ref, we2_ref, wd1_ref, wd2_ref,
               out_ref):
    # Static sizes derived from the packed weight shapes.
    D = x_ref.shape[1]            # data_dim
    MD = wg2_ref.shape[1]         # mask_num * data_dim
    MZ = we2_ref.shape[1]         # mask_num * z_dim
    M = MD // D
    cdt = wg1_ref.dtype           # matmul-operand dtype (f32 or bf16)

    x = x_ref[...]                # (TB, D), f32

    # --- mask generator, all M nets fused into 2 matmuls ------------------
    h = _leaky_relu(jnp.dot(x.astype(cdt), wg1_ref[...],
                            preferred_element_type=jnp.float32))      # (TB, M*H)
    logits = jnp.dot(h.astype(cdt), wg2_ref[...],
                     preferred_element_type=jnp.float32)              # (TB, M*D)
    masks = jax.nn.sigmoid(logits)                                    # f32

    # Replicate x along lanes *inside* the kernel (VPU work on already-loaded
    # lanes; no M-times-replicated HBM input stream).
    x_rep = jnp.concatenate([x] * M, axis=-1)                         # (TB, M*D)
    xm = x_rep * masks                                                # f32

    # --- shared encoder (block-diag replicated weights, one matmul each) --
    he = _leaky_relu(jnp.dot(xm.astype(cdt), we1_ref[...],
                             preferred_element_type=jnp.float32))     # (TB, M*H)
    z = jnp.dot(he.astype(cdt), we2_ref[...],
                preferred_element_type=jnp.float32)                   # (TB, M*Z)

    # --- shared decoder ----------------------------------------------------
    hd = _leaky_relu(jnp.dot(z.astype(cdt), wd1_ref[...],
                             preferred_element_type=jnp.float32))     # (TB, M*H)
    xp = jnp.dot(hd.astype(cdt), wd2_ref[...],
                 preferred_element_type=jnp.float32)                  # (TB, M*D)

    # Single lane-dense store: [x_pred | masks | z].  First 2*M*D lanes are
    # 128-aligned (unmasked vst); only the z tail is a masked store.
    out_ref[...] = jnp.concatenate([xp, masks, z], axis=-1)


def pack_weights(params, *, mask_num, compute_dtype=jnp.float32):
    """One-time weight packing (hoisted off the per-forward hot path)."""
    wg1, wg2 = params["wg1"], params["wg2"]      # (M,D,H), (M,H,D)
    we1, we2 = params["we1"], params["we2"]      # (D,H),   (H,Z)
    wd1, wd2 = params["wd1"], params["wd2"]      # (Z,H),   (H,D)
    M = mask_num
    D, H = we1.shape
    eye = jnp.eye(M, dtype=jnp.float32)
    packed = {
        "wg1": jnp.transpose(wg1, (1, 0, 2)).reshape(D, M * H),   # (D, M*H)
        "wg2": jax.scipy.linalg.block_diag(*wg2),                 # (M*H, M*D)
        "we1": jnp.kron(eye, we1),                                # (M*D, M*H)
        "we2": jnp.kron(eye, we2),                                # (M*H, M*Z)
        "wd1": jnp.kron(eye, wd1),                                # (M*Z, M*H)
        "wd2": jnp.kron(eye, wd2),                                # (M*H, M*D)
    }
    return jax.tree_util.tree_map(lambda w: w.astype(compute_dtype), packed)


@partial(jax.jit, static_argnames=("mask_num",))
def mcm_forward(x, packed, *, mask_num):
    """x: (B, D) f32; packed: output of pack_weights.
    Returns (x_pred (B,M,D), z (B,M,Z), masks (B,M,D))."""
    B, D = x.shape
    M = mask_num
    MH = packed["wg1"].shape[1]          # M * hidden_dim
    MD = packed["wg2"].shape[1]          # M * data_dim
    MZ = packed["we2"].shape[1]          # M * z_dim
    Z = MZ // M
    TOT = 2 * MD + MZ                    # [x_pred | masks | z]

    tb = _pick_batch_tile(B)
    grid = (pl.cdiv(B, tb),)

    # Grid-invariant weights: single-buffered (index_map is constant).
    def w_spec(shape):
        return pl.BlockSpec(shape, lambda i: (0, 0),
                            pipeline_mode=pl.Buffered(1))

    flops = 2 * B * (D * MH + MH * MD + MD * MH + MH * MZ + MZ * MH + MH * MD)
    w_bytes = sum(int(w.size) * w.dtype.itemsize for w in packed.values())
    cost = pl.CostEstimate(
        flops=flops,
        transcendentals=B * MD,                       # sigmoid exp
        bytes_accessed=4 * B * (D + TOT) + w_bytes)

    grid_spec = pltpu.PrefetchScalarGridSpec(
        num_scalar_prefetch=0,
        grid=grid,
        in_specs=[
            pl.BlockSpec((tb, D), lambda i: (i, 0)),   # x (plain, no tiling in HBM)
            w_spec((D, MH)),                           # gen layer 1 (fused)
            w_spec((MH, MD)),                          # gen layer 2 (block-diag)
            w_spec((MD, MH)),                          # encoder layer 1
            w_spec((MH, MZ)),                          # encoder layer 2
            w_spec((MZ, MH)),                          # decoder layer 1
            w_spec((MH, MD)),                          # decoder layer 2
        ],
        out_specs=pl.BlockSpec((tb, TOT), lambda i: (i, 0)),  # packed slab
    )

    out = pl.pallas_call(
        mcm_kernel,
        out_shape=jax.ShapeDtypeStruct((B, TOT), jnp.float32),
        grid_spec=grid_spec,
        compiler_params=pltpu.CompilerParams(
            dimension_semantics=("parallel",)),
        cost_estimate=cost,
    )(x, packed["wg1"], packed["wg2"], packed["we1"], packed["we2"],
      packed["wd1"], packed["wd2"])

    # Slice + reshape only (already batch-major; no transposes).
    x_pred = out[:, :MD].reshape(B, M, D)
    masks = out[:, MD:2 * MD].reshape(B, M, D)
    z = out[:, 2 * MD:].reshape(B, M, Z)
    return x_pred, z, masks


def init_params(key, *, data_dim, hidden_dim, z_dim, mask_num):
    ks = jax.random.split(key, 6)
    s = 0.1
    return {
        # mask generator: mask_num independent 2-layer MLPs (stored (in, out))
        "wg1": s * jax.random.normal(ks[0], (mask_num, data_dim, hidden_dim), jnp.float32),
        "wg2": s * jax.random.normal(ks[1], (mask_num, hidden_dim, data_dim), jnp.float32),
        # encoder (en_nlayers=2): Linear(D,H,bias=False), LeakyReLU, Linear(H,Z,bias=False)
        "we1": s * jax.random.normal(ks[2], (data_dim, hidden_dim), jnp.float32),
        "we2": s * jax.random.normal(ks[3], (hidden_dim, z_dim), jnp.float32),
        # decoder (de_nlayers=2): Linear(Z,H,bias=False), LeakyReLU, Linear(H,D,bias=False)
        "wd1": s * jax.random.normal(ks[4], (z_dim, hidden_dim), jnp.float32),
        "wd2": s * jax.random.normal(ks[5], (hidden_dim, data_dim), jnp.float32),
    }


def _reference(x, params):
    """Pure-JAX reference for a sanity check."""
    def lrelu(v):
        return jnp.where(v > 0, v, 0.2 * v)
    m = jax.nn.sigmoid(
        jnp.einsum("mhd,bmh->bmd", params["wg2"],
                   lrelu(jnp.einsum("mdh,bd->bmh", params["wg1"], x))))
    xm = x[:, None, :] * m                                  # (B, M, D)
    z = lrelu(xm @ params["we1"]) @ params["we2"]
    xp = lrelu(z @ params["wd1"]) @ params["wd2"]
    return xp, z, m


if __name__ == "__main__":
    # Small config implied by the module's __init__.
    model_config = dict(data_dim=16, hidden_dim=32, z_dim=8, mask_num=4,
                        en_nlayers=2, de_nlayers=2)
    B = 8

    key = jax.random.PRNGKey(0)
    k_x, k_p = jax.random.split(key)
    x = jax.random.normal(k_x, (B, model_config["data_dim"]), jnp.float32)
    params = init_params(k_p,
                         data_dim=model_config["data_dim"],
                         hidden_dim=model_config["hidden_dim"],
                         z_dim=model_config["z_dim"],
                         mask_num=model_config["mask_num"])

    # Pack once (off the hot path).  For large configs on v6e/v7x pass
    # compute_dtype=jnp.bfloat16 here (and loosen the tolerance below).
    packed = pack_weights(params, mask_num=model_config["mask_num"],
                          compute_dtype=jnp.float32)

    x_pred, z, masks = jax.block_until_ready(
        mcm_forward(x, packed, mask_num=model_config["mask_num"]))

    xp_ref, z_ref, m_ref = _reference(x, params)
    assert x_pred.shape == (B, model_config["mask_num"], model_config["data_dim"])
    assert z.shape == (B, model_config["mask_num"], model_config["z_dim"])
    assert masks.shape == (B, model_config["mask_num"], model_config["data_dim"])
    assert jnp.allclose(x_pred, xp_ref, atol=1e-4)
    assert jnp.allclose(z, z_ref, atol=1e-4)
    assert jnp.allclose(masks, m_ref, atol=1e-4)

    print("KERNEL_OK")
</pallas_src>

<mosaic_0001>
module attributes {stable_mosaic.version = 11 : i64} {
  func.func @mcm_kernel(%arg0: i32, %arg1: memref<8x16xf32, #tpu.memory_space<vmem>>, %arg2: memref<16x128xf32, #tpu.memory_space<vmem>>, %arg3: memref<128x64xf32, #tpu.memory_space<vmem>>, %arg4: memref<64x128xf32, #tpu.memory_space<vmem>>, %arg5: memref<128x32xf32, #tpu.memory_space<vmem>>, %arg6: memref<32x128xf32, #tpu.memory_space<vmem>>, %arg7: memref<128x64xf32, #tpu.memory_space<vmem>>, %arg8: memref<8x160xf32, #tpu.memory_space<vmem>>) attributes {dimension_semantics = [#tpu.dimension_semantics<parallel>], iteration_bounds = array<i64: 1>, scalar_prefetch = 0 : i64, scratch_operands = 0 : i64, tpu.core_type = #tpu.core_type<tc>, window_params = [{transform_indices = @transform_0, window_bounds = array<i64: 8, 16>}, {pipeline_mode = #tpu.pipeline_mode<synchronous>, transform_indices = @transform_1, window_bounds = array<i64: 16, 128>}, {pipeline_mode = #tpu.pipeline_mode<synchronous>, transform_indices = @transform_2, window_bounds = array<i64: 128, 64>}, {pipeline_mode = #tpu.pipeline_mode<synchronous>, transform_indices = @transform_3, window_bounds = array<i64: 64, 128>}, {pipeline_mode = #tpu.pipeline_mode<synchronous>, transform_indices = @transform_4, window_bounds = array<i64: 128, 32>}, {pipeline_mode = #tpu.pipeline_mode<synchronous>, transform_indices = @transform_5, window_bounds = array<i64: 32, 128>}, {pipeline_mode = #tpu.pipeline_mode<synchronous>, transform_indices = @transform_6, window_bounds = array<i64: 128, 64>}, {transform_indices = @transform_7, window_bounds = array<i64: 8, 160>}]} {
    %c0 = arith.constant 0 : index
    %c0_0 = arith.constant 0 : index
    %0 = vector.load %arg1[%c0, %c0_0] : memref<8x16xf32, #tpu.memory_space<vmem>>, vector<8x16xf32>
    %c0_1 = arith.constant 0 : index
    %c0_2 = arith.constant 0 : index
    %1 = vector.load %arg2[%c0_1, %c0_2] : memref<16x128xf32, #tpu.memory_space<vmem>>, vector<16x128xf32>
    %cst = arith.constant dense<0.000000e+00> : vector<8x128xf32>
    %2 = tpu.matmul %0, %1, %cst {dimension_numbers = #tpu.dot_dimension_numbers<[1], [0], [0], [1], [0, 0, 1, 1], [], []>} : vector<8x16xf32>, vector<16x128xf32>, vector<8x128xf32> -> vector<8x128xf32>
    %cst_3 = arith.constant 2.000000e-01 : f32
    %3 = vector.broadcast %cst_3 : f32 to vector<8x128xf32>
    %4 = arith.mulf %3, %2 : vector<8x128xf32>
    %5 = arith.maximumf %2, %4 : vector<8x128xf32>
    %c0_4 = arith.constant 0 : index
    %c0_5 = arith.constant 0 : index
    %6 = vector.load %arg3[%c0_4, %c0_5] : memref<128x64xf32, #tpu.memory_space<vmem>>, vector<128x64xf32>
    %cst_6 = arith.constant dense<0.000000e+00> : vector<8x64xf32>
    %7 = tpu.matmul %5, %6, %cst_6 {dimension_numbers = #tpu.dot_dimension_numbers<[1], [0], [0], [1], [0, 0, 1, 1], [], []>} : vector<8x128xf32>, vector<128x64xf32>, vector<8x64xf32> -> vector<8x64xf32>
    %8 = arith.negf %7 : vector<8x64xf32>
    %9 = math.exp %8 : vector<8x64xf32>
    %cst_7 = arith.constant 1.000000e+00 : f32
    %10 = vector.broadcast %cst_7 : f32 to vector<8x64xf32>
    %11 = arith.addf %10, %9 : vector<8x64xf32>
    %12 = arith.divf %10, %11 : vector<8x64xf32>
    %13 = tpu.concatenate %0, %0, %0, %0 in 1 : vector<8x16xf32>, vector<8x16xf32>, vector<8x16xf32>, vector<8x16xf32> -> vector<8x64xf32>
    %14 = arith.mulf %13, %12 : vector<8x64xf32>
    %c0_8 = arith.constant 0 : index
    %c0_9 = arith.constant 0 : index
    %15 = vector.load %arg4[%c0_8, %c0_9] : memref<64x128xf32, #tpu.memory_space<vmem>>, vector<64x128xf32>
    %cst_10 = arith.constant dense<0.000000e+00> : vector<8x128xf32>
    %16 = tpu.matmul %14, %15, %cst_10 {dimension_numbers = #tpu.dot_dimension_numbers<[1], [0], [0], [1], [0, 0, 1, 1], [], []>} : vector<8x64xf32>, vector<64x128xf32>, vector<8x128xf32> -> vector<8x128xf32>
    %cst_11 = arith.constant 2.000000e-01 : f32
    %17 = vector.broadcast %cst_11 : f32 to vector<8x128xf32>
    %18 = arith.mulf %17, %16 : vector<8x128xf32>
    %19 = arith.maximumf %16, %18 : vector<8x128xf32>
    %c0_12 = arith.constant 0 : index
    %c0_13 = arith.constant 0 : index
    %20 = vector.load %arg5[%c0_12, %c0_13] : memref<128x32xf32, #tpu.memory_space<vmem>>, vector<128x32xf32>
    %cst_14 = arith.constant dense<0.000000e+00> : vector<8x32xf32>
    %21 = tpu.matmul %19, %20, %cst_14 {dimension_numbers = #tpu.dot_dimension_numbers<[1], [0], [0], [1], [0, 0, 1, 1], [], []>} : vector<8x128xf32>, vector<128x32xf32>, vector<8x32xf32> -> vector<8x32xf32>
    %c0_15 = arith.constant 0 : index
    %c0_16 = arith.constant 0 : index
    %22 = vector.load %arg6[%c0_15, %c0_16] : memref<32x128xf32, #tpu.memory_space<vmem>>, vector<32x128xf32>
    %cst_17 = arith.constant dense<0.000000e+00> : vector<8x128xf32>
    %23 = tpu.matmul %21, %22, %cst_17 {dimension_numbers = #tpu.dot_dimension_numbers<[1], [0], [0], [1], [0, 0, 1, 1], [], []>} : vector<8x32xf32>, vector<32x128xf32>, vector<8x128xf32> -> vector<8x128xf32>
    %cst_18 = arith.constant 2.000000e-01 : f32
    %24 = vector.broadcast %cst_18 : f32 to vector<8x128xf32>
    %25 = arith.mulf %24, %23 : vector<8x128xf32>
    %26 = arith.maximumf %23, %25 : vector<8x128xf32>
    %c0_19 = arith.constant 0 : index
    %c0_20 = arith.constant 0 : index
    %27 = vector.load %arg7[%c0_19, %c0_20] : memref<128x64xf32, #tpu.memory_space<vmem>>, vector<128x64xf32>
    %cst_21 = arith.constant dense<0.000000e+00> : vector<8x64xf32>
    %28 = tpu.matmul %26, %27, %cst_21 {dimension_numbers = #tpu.dot_dimension_numbers<[1], [0], [0], [1], [0, 0, 1, 1], [], []>} : vector<8x128xf32>, vector<128x64xf32>, vector<8x64xf32> -> vector<8x64xf32>
    %29 = tpu.concatenate %28, %12, %21 in 1 : vector<8x64xf32>, vector<8x64xf32>, vector<8x32xf32> -> vector<8x160xf32>
    %c0_22 = arith.constant 0 : index
    %c0_23 = arith.constant 0 : index
    %30 = vector.load %arg8[%c0_22, %c0_23] : memref<8x160xf32, #tpu.memory_space<vmem>>, vector<8x160xf32>
    tpu.vector_store %arg8[%c0_22, %c0_23], %29 {strides = array<i32>} : memref<8x160xf32, #tpu.memory_space<vmem>>, vector<8x160xf32>,
    return
  }
  func.func @transform_0(%arg0: i32) -> (i32, i32) {
    %c0_i32 = arith.constant 0 : i32
    %c0_i32_0 = arith.constant 0 : i32
    return %arg0, %c0_i32 : i32, i32
  }
  func.func @transform_1(%arg0: i32) -> (i32, i32) {
    %c0_i32 = arith.constant 0 : i32
    %c0_i32_0 = arith.constant 0 : i32
    %c0_i32_1 = arith.constant 0 : i32
    return %c0_i32, %c0_i32_0 : i32, i32
  }
  func.func @transform_2(%arg0: i32) -> (i32, i32) {
    %c0_i32 = arith.constant 0 : i32
    %c0_i32_0 = arith.constant 0 : i32
    %c0_i32_1 = arith.constant 0 : i32
    return %c0_i32, %c0_i32_0 : i32, i32
  }
  func.func @transform_3(%arg0: i32) -> (i32, i32) {
    %c0_i32 = arith.constant 0 : i32
    %c0_i32_0 = arith.constant 0 : i32
    %c0_i32_1 = arith.constant 0 : i32
    return %c0_i32, %c0_i32_0 : i32, i32
  }
  func.func @transform_4(%arg0: i32) -> (i32, i32) {
    %c0_i32 = arith.constant 0 : i32
    %c0_i32_0 = arith.constant 0 : i32
    %c0_i32_1 = arith.constant 0 : i32
    return %c0_i32, %c0_i32_0 : i32, i32
  }
  func.func @transform_5(%arg0: i32) -> (i32, i32) {
    %c0_i32 = arith.constant 0 : i32
    %c0_i32_0 = arith.constant 0 : i32
    %c0_i32_1 = arith.constant 0 : i32
    return %c0_i32, %c0_i32_0 : i32, i32
  }
  func.func @transform_6(%arg0: i32) -> (i32, i32) {
    %c0_i32 = arith.constant 0 : i32
    %c0_i32_0 = arith.constant 0 : i32
    %c0_i32_1 = arith.constant 0 : i32
    return %c0_i32, %c0_i32_0 : i32, i32
  }
  func.func @transform_7(%arg0: i32) -> (i32, i32) {
    %c0_i32 = arith.constant 0 : i32
    %c0_i32_0 = arith.constant 0 : i32
    return %arg0, %c0_i32 : i32, i32
  }
}

</mosaic_0001>

<llo_original>
// kernel: mcm_forward.1
$region0: #{mcm_forward.1}
  #allocation0 [shape = 'u32[]', space=smem, size = 0x4, offset = 0x4, fixed_abs, tag = 'smem constant byte address 0x4 - core index']
  #allocation1 [shape = 'u32[144,128]{1,0:T(1,128)}', space=vmem, size = 0x12000, scoped, tag = 'internal scratch']
  %s0 = inlined_call_operand.vmem [shape: f32[8,16], index: 0, kind: input, shape index: {}]
  %s1 = inlined_call_operand.vmem [shape: f32[16,128], index: 1, kind: input, shape index: {}]
  %s2 = inlined_call_operand.vmem [shape: f32[128,64], index: 2, kind: input, shape index: {}]
  %s3 = inlined_call_operand.vmem [shape: f32[64,128], index: 3, kind: input, shape index: {}]
  %s4 = inlined_call_operand.vmem [shape: f32[128,32], index: 4, kind: input, shape index: {}]
  %s5 = inlined_call_operand.vmem [shape: f32[32,128], index: 5, kind: input, shape index: {}]
  %s6 = inlined_call_operand.vmem [shape: f32[128,64], index: 6, kind: input, shape index: {}]
  %s7 = inlined_call_operand.vmem [shape: f32[8,160], index: 7, kind: output, shape index: {}]
  %s8 = sld [smem:[#allocation0]]
  $region38: #{mcm_forward.1} parent=0
    _
  %s10 = ssub.s32 1, %s8
  %s11 = scalar_select 0, %s10, %s8
  // Predicated region
  $region2: #{mcm_forward.1} parent=0 // pred_check
    _
  $region3: #{mcm_forward.1} parent=0 // pred_check_branch
    %13 = sbr.rel (0) target = $region5
  $region4: #{mcm_forward.1} parent=0 // pred_region
    _
  $region5: #{mcm_forward.1} parent=0 // pred_fallthru
    _
  // Predicated region
  $region6: #{mcm_forward.1} parent=0 // pred_check
    _
  $region7: #{mcm_forward.1} parent=0 // pred_check_branch
    %15 = sbr.rel (0) target = $region9
  $region8: #{mcm_forward.1} parent=0 // pred_region
    _
  $region9: #{mcm_forward.1} parent=0 // pred_fallthru
    _
  // Predicated region
  $region10: #{mcm_forward.1} parent=0 // pred_check
    _
  $region11: #{mcm_forward.1} parent=0 // pred_check_branch
    %17 = sbr.rel (0) target = $region13
  $region12: #{mcm_forward.1} parent=0 // pred_region
    _
  $region13: #{mcm_forward.1} parent=0 // pred_fallthru
    _
  // Predicated region
  $region14: #{mcm_forward.1} parent=0 // pred_check
    _
  $region15: #{mcm_forward.1} parent=0 // pred_check_branch
    %19 = sbr.rel (0) target = $region17
  $region16: #{mcm_forward.1} parent=0 // pred_region
    _
  $region17: #{mcm_forward.1} parent=0 // pred_fallthru
    _
  // Predicated region
  $region18: #{mcm_forward.1} parent=0 // pred_check
    _
  $region19: #{mcm_forward.1} parent=0 // pred_check_branch
    %21 = sbr.rel (0) target = $region21
  $region20: #{mcm_forward.1} parent=0 // pred_region
    _
  $region21: #{mcm_forward.1} parent=0 // pred_fallthru
    _
  // Predicated region
  $region22: #{mcm_forward.1} parent=0 // pred_check
    _
  $region23: #{mcm_forward.1} parent=0 // pred_check_branch
    %23 = sbr.rel (0) target = $region25
  $region24: #{mcm_forward.1} parent=0 // pred_region
    _
  $region25: #{mcm_forward.1} parent=0 // pred_fallthru
    _
  // Predicated region
  $region26: #{mcm_forward.1} parent=0 // pred_check
    _
  $region27: #{mcm_forward.1} parent=0 // pred_check_branch
    %25 = sbr.rel (0) target = $region29
  $region28: #{mcm_forward.1} parent=0 // pred_region
    _
  $region29: #{mcm_forward.1} parent=0 // pred_fallthru
    _
  %v26 = vld [vmem:[%s0] sm:$0xff]
  %v27 = vld [vmem:[%s1] sm:$0xff]
  %v28 = vld [vmem:[%s1 + $0x8] sm:$0xff]
  %vm29 = vcmask 130048
  %v31 = vsel %vm29, %v26, 0
  %33 = vmatprep.subr.mxu0 0.0
  %34 = vmatpush1.msra.mxu0 0.0
  %35 = vmatprep.subr.mxu0 0.0
  %36 = vmatpush1.msra.mxu0 0.0
  %37 = vmatprep.subr.mxu0 0.0
  %38 = vmatpush1.msra.mxu0 0.0
  %39 = vmatprep.subr.mxu0 0.0
  %40 = vmatpush1.msra.mxu0 0.0
  %41 = vmatprep.subr.mxu0 0.0
  %42 = vmatpush1.msra.mxu0 0.0
  %43 = vmatprep.subr.mxu0 0.0
  %44 = vmatpush1.msra.mxu0 0.0
  %45 = vmatprep.subr.mxu0 0.0
  %46 = vmatpush1.msra.mxu0 0.0
  %47 = vmatprep.subr.mxu0 0.0
  %48 = vmatpush1.msra.mxu0 0.0
  %49 = vmatprep.subr.mxu0 0.0
  %50 = vmatpush1.msra.mxu0 0.0
  %51 = vmatprep.subr.mxu0 0.0
  %52 = vmatpush1.msra.mxu0 0.0
  %53 = vmatprep.subr.mxu0 0.0
  %54 = vmatpush1.msra.mxu0 0.0
  %55 = vmatprep.subr.mxu0 0.0
  %56 = vmatpush1.msra.mxu0 0.0
  %57 = vmatprep.subr.mxu0 0.0
  %58 = vmatpush1.msra.mxu0 0.0
  %59 = vmatprep.subr.mxu0 0.0
  %60 = vmatpush1.msra.mxu0 0.0
  %61 = vmatprep.subr.mxu0 0.0
  %62 = vmatpush1.msra.mxu0 %v28
  %63 = vmatprep.subr.mxu0 0.0
  %64 = vmatpush1.msra.mxu0 %v27
  %65 = vmatprep.subr.mxu0 0.0
  %66 = vmatpush2.msra.mxu0 0.0
  %67 = vmatprep.subr.mxu0 0.0
  %68 = vmatpush2.msra.mxu0 0.0
  %69 = vmatprep.subr.mxu0 0.0
  %70 = vmatpush2.msra.mxu0 0.0
  %71 = vmatprep.subr.mxu0 0.0
  %72 = vmatpush2.msra.mxu0 0.0
  %73 = vmatprep.subr.mxu0 0.0
  %74 = vmatpush2.msra.mxu0 0.0
  %75 = vmatprep.subr.mxu0 0.0
  %76 = vmatpush2.msra.mxu0 0.0
  %77 = vmatprep.subr.mxu0 0.0
  %78 = vmatpush2.msra.mxu0 0.0
  %79 = vmatprep.subr.mxu0 0.0
  %80 = vmatpush2.msra.mxu0 0.0
  %81 = vmatprep.subr.mxu0 0.0
  %82 = vmatpush2.msra.mxu0 0.0
  %83 = vmatprep.subr.mxu0 0.0
  %84 = vmatpush2.msra.mxu0 0.0
  %85 = vmatprep.subr.mxu0 0.0
  %86 = vmatpush2.msra.mxu0 0.0
  %87 = vmatprep.subr.mxu0 0.0
  %88 = vmatpush2.msra.mxu0 0.0
  %89 = vmatprep.subr.mxu0 0.0
  %90 = vmatpush2.msra.mxu0 0.0
  %91 = vmatprep.subr.mxu0 0.0
  %92 = vmatpush2.msra.mxu0 0.0
  %93 = vmatprep.subr.mxu0 0.0
  %94 = vmatpush2.msra.mxu0 0.0
  %95 = vmatprep.subr.mxu0 0.0
  %96 = vmatpush2.msra.mxu0 0.0
  %97 = vmatprep.mubr.f32.mxu0 0.0
  %98 = vmatmul.mubr.f32.gmra.mxu0 %v31
  %v99 = vpop.f32.mrf.mxu0
  %v100 = vadd.f32 0.0, %v99
  %v101 = vpop.f32.mrf.mxu0
  %102 = vdwg.mxu0
  %v103 = vmul.f32 %v100, 0.2
  %v104 = vmax.f32 %v100, %v103
  %v105 = vld [vmem:[%s2] sm:$0xff]
  %v106 = vld [vmem:[%s2 + $0x8] sm:$0xff]
  %v107 = vld [vmem:[%s2 + $0x10] sm:$0xff]
  %v108 = vld [vmem:[%s2 + $0x18] sm:$0xff]
  %v109 = vld [vmem:[%s2 + $0x20] sm:$0xff]
  %v110 = vld [vmem:[%s2 + $0x28] sm:$0xff]
  %v111 = vld [vmem:[%s2 + $0x30] sm:$0xff]
  %v112 = vld [vmem:[%s2 + $0x38] sm:$0xff]
  %v113 = vld [vmem:[%s2 + $0x40] sm:$0xff]
  %v114 = vld [vmem:[%s2 + $0x48] sm:$0xff]
  %v115 = vld [vmem:[%s2 + $0x50] sm:$0xff]
  %v116 = vld [vmem:[%s2 + $0x58] sm:$0xff]
  %v117 = vld [vmem:[%s2 + $0x60] sm:$0xff]
  %v118 = vld [vmem:[%s2 + $0x68] sm:$0xff]
  %v119 = vld [vmem:[%s2 + $0x70] sm:$0xff]
  %v120 = vld [vmem:[%s2 + $0x78] sm:$0xff]
  %121 = vmatprep.subr.mxu0 0.0
  %122 = vmatpush1.msra.mxu0 %v120
  %123 = vmatprep.subr.mxu0 0.0
  %124 = vmatpush1.msra.mxu0 %v119
  %125 = vmatprep.subr.mxu0 0.0
  %126 = vmatpush1.msra.mxu0 %v118
  %127 = vmatprep.subr.mxu0 0.0
  %128 = vmatpush1.msra.mxu0 %v117
  %129 = vmatprep.subr.mxu0 0.0
  %130 = vmatpush1.msra.mxu0 %v116
  %131 = vmatprep.subr.mxu0 0.0
  %132 = vmatpush1.msra.mxu0 %v115
  %133 = vmatprep.subr.mxu0 0.0
  %134 = vmatpush1.msra.mxu0 %v114
  %135 = vmatprep.subr.mxu0 0.0
  %136 = vmatpush1.msra.mxu0 %v113
  %137 = vmatprep.subr.mxu0 0.0
  %138 = vmatpush1.msra.mxu0 %v112
  %139 = vmatprep.subr.mxu0 0.0
  %140 = vmatpush1.msra.mxu0 %v111
  %141 = vmatprep.subr.mxu0 0.0
  %142 = vmatpush1.msra.mxu0 %v110
  %143 = vmatprep.subr.mxu0 0.0
  %144 = vmatpush1.msra.mxu0 %v109
  %145 = vmatprep.subr.mxu0 0.0
  %146 = vmatpush1.msra.mxu0 %v108
  %147 = vmatprep.subr.mxu0 0.0
  %148 = vmatpush1.msra.mxu0 %v107
  %149 = vmatprep.subr.mxu0 0.0
  %150 = vmatpush1.msra.mxu0 %v106
  %151 = vmatprep.subr.mxu0 0.0
  %152 = vmatpush1.msra.mxu0 %v105
  %153 = vmatprep.subr.mxu0 0.0
  %154 = vmatpush2.msra.mxu0 0.0
  %155 = vmatprep.subr.mxu0 0.0
  %156 = vmatpush2.msra.mxu0 0.0
  %157 = vmatprep.subr.mxu0 0.0
  %158 = vmatpush2.msra.mxu0 0.0
  %159 = vmatprep.subr.mxu0 0.0
  %160 = vmatpush2.msra.mxu0 0.0
  %161 = vmatprep.subr.mxu0 0.0
  %162 = vmatpush2.msra.mxu0 0.0
  %163 = vmatprep.subr.mxu0 0.0
  %164 = vmatpush2.msra.mxu0 0.0
  %165 = vmatprep.subr.mxu0 0.0
  %166 = vmatpush2.msra.mxu0 0.0
  %167 = vmatprep.subr.mxu0 0.0
  %168 = vmatpush2.msra.mxu0 0.0
  %169 = vmatprep.subr.mxu0 0.0
  %170 = vmatpush2.msra.mxu0 0.0
  %171 = vmatprep.subr.mxu0 0.0
  %172 = vmatpush2.msra.mxu0 0.0
  %173 = vmatprep.subr.mxu0 0.0
  %174 = vmatpush2.msra.mxu0 0.0
  %175 = vmatprep.subr.mxu0 0.0
  %176 = vmatpush2.msra.mxu0 0.0
  %177 = vmatprep.subr.mxu0 0.0
  %178 = vmatpush2.msra.mxu0 0.0
  %179 = vmatprep.subr.mxu0 0.0
  %180 = vmatpush2.msra.mxu0 0.0
  %181 = vmatprep.subr.mxu0 0.0
  %182 = vmatpush2.msra.mxu0 0.0
  %183 = vmatprep.subr.mxu0 0.0
  %184 = vmatpush2.msra.mxu0 0.0
  %185 = vmatprep.mubr.f32.mxu0 0.0
  %186 = vmatmul.mubr.f32.gmra.mxu0 %v104
  %v187 = vpop.f32.mrf.mxu0
  %v188 = vadd.f32 0.0, %v187
  %v189 = vpop.f32.mrf.mxu0
  %190 = vdwg.mxu0
  %v191 = vxor.u32 %v188, 2147483648
  %v192 = vmul.f32 %v191, 1.442695
  %v193 = vpow.pop %v192
  %v194 = vadd.f32 %v193, 1.0
  %v195 = vrcp.pop %v194
  %v196 = vmul.f32 1.0, %v195
  %197 = vrot.lane.b32.xlu0 %v26, 16
  %v198 = vpop.permute.xlu0 %197
  %200 = vrot.lane.b32.xlu0 %v26, 32
  %v201 = vpop.permute.xlu0 %200
  %203 = vrot.lane.b32.xlu0 %v26, 48
  %v204 = vpop.permute.xlu0 %203
  %v206 = vsel %vm29, %v26, %v198
  %vm207 = vcmask 261120
  %v208 = vsel %vm207, %v206, %v201
  %vm209 = vcmask 392192
  %v210 = vsel %vm209, %v208, %v204
  %v211 = vmul.f32 %v210, %v196
  %v212 = vld [vmem:[%s3] sm:$0xff]
  %v213 = vld [vmem:[%s3 + $0x8] sm:$0xff]
  %v214 = vld [vmem:[%s3 + $0x10] sm:$0xff]
  %v215 = vld [vmem:[%s3 + $0x18] sm:$0xff]
  %v216 = vld [vmem:[%s3 + $0x20] sm:$0xff]
  %v217 = vld [vmem:[%s3 + $0x28] sm:$0xff]
  %v218 = vld [vmem:[%s3 + $0x30] sm:$0xff]
  %v219 = vld [vmem:[%s3 + $0x38] sm:$0xff]
  %vm220 = vcmask 523264
  %v222 = vsel %vm220, %v211, 0
  %224 = vmatprep.subr.mxu0 0.0
  %225 = vmatpush1.msra.mxu0 0.0
  %226 = vmatprep.subr.mxu0 0.0
  %227 = vmatpush1.msra.mxu0 0.0
  %228 = vmatprep.subr.mxu0 0.0
  %229 = vmatpush1.msra.mxu0 0.0
  %230 = vmatprep.subr.mxu0 0.0
  %231 = vmatpush1.msra.mxu0 0.0
  %232 = vmatprep.subr.mxu0 0.0
  %233 = vmatpush1.msra.mxu0 0.0
  %234 = vmatprep.subr.mxu0 0.0
  %235 = vmatpush1.msra.mxu0 0.0
  %236 = vmatprep.subr.mxu0 0.0
  %237 = vmatpush1.msra.mxu0 0.0
  %238 = vmatprep.subr.mxu0 0.0
  %239 = vmatpush1.msra.mxu0 0.0
  %240 = vmatprep.subr.mxu0 0.0
  %241 = vmatpush1.msra.mxu0 %v219
  %242 = vmatprep.subr.mxu0 0.0
  %243 = vmatpush1.msra.mxu0 %v218
  %244 = vmatprep.subr.mxu0 0.0
  %245 = vmatpush1.msra.mxu0 %v217
  %246 = vmatprep.subr.mxu0 0.0
  %247 = vmatpush1.msra.mxu0 %v216
  %248 = vmatprep.subr.mxu0 0.0
  %249 = vmatpush1.msra.mxu0 %v215
  %250 = vmatprep.subr.mxu0 0.0
  %251 = vmatpush1.msra.mxu0 %v214
  %252 = vmatprep.subr.mxu0 0.0
  %253 = vmatpush1.msra.mxu0 %v213
  %254 = vmatprep.subr.mxu0 0.0
  %255 = vmatpush1.msra.mxu0 %v212
  %256 = vmatprep.subr.mxu0 0.0
  %257 = vmatpush2.msra.mxu0 0.0
  %258 = vmatprep.subr.mxu0 0.0
  %259 = vmatpush2.msra.mxu0 0.0
  %260 = vmatprep.subr.mxu0 0.0
  %261 = vmatpush2.msra.mxu0 0.0
  %262 = vmatprep.subr.mxu0 0.0
  %263 = vmatpush2.msra.mxu0 0.0
  %264 = vmatprep.subr.mxu0 0.0
  %265 = vmatpush2.msra.mxu0 0.0
  %266 = vmatprep.subr.mxu0 0.0
  %267 = vmatpush2.msra.mxu0 0.0
  %268 = vmatprep.subr.mxu0 0.0
  %269 = vmatpush2.msra.mxu0 0.0
  %270 = vmatprep.subr.mxu0 0.0
  %271 = vmatpush2.msra.mxu0 0.0
  %272 = vmatprep.subr.mxu0 0.0
  %273 = vmatpush2.msra.mxu0 0.0
  %274 = vmatprep.subr.mxu0 0.0
  %275 = vmatpush2.msra.mxu0 0.0
  %276 = vmatprep.subr.mxu0 0.0
  %277 = vmatpush2.msra.mxu0 0.0
  %278 = vmatprep.subr.mxu0 0.0
  %279 = vmatpush2.msra.mxu0 0.0
  %280 = vmatprep.subr.mxu0 0.0
  %281 = vmatpush2.msra.mxu0 0.0
  %282 = vmatprep.subr.mxu0 0.0
  %283 = vmatpush2.msra.mxu0 0.0
  %284 = vmatprep.subr.mxu0 0.0
  %285 = vmatpush2.msra.mxu0 0.0
  %286 = vmatprep.subr.mxu0 0.0
  %287 = vmatpush2.msra.mxu0 0.0
  %288 = vmatprep.mubr.f32.mxu0 0.0
  %289 = vmatmul.mubr.f32.gmra.mxu0 %v222
  %v290 = vpop.f32.mrf.mxu0
  %v291 = vadd.f32 0.0, %v290
  %v292 = vpop.f32.mrf.mxu0
  %293 = vdwg.mxu0
  %v294 = vmul.f32 %v291, 0.2
  %v295 = vmax.f32 %v291, %v294
  %v296 = vld [vmem:[%s4] sm:$0xff]
  %v297 = vld [vmem:[%s4 + $0x8] sm:$0xff]
  %v298 = vld [vmem:[%s4 + $0x10] sm:$0xff]
  %v299 = vld [vmem:[%s4 + $0x18] sm:$0xff]
  %v300 = vld [vmem:[%s4 + $0x20] sm:$0xff]
  %v301 = vld [vmem:[%s4 + $0x28] sm:$0xff]
  %v302 = vld [vmem:[%s4 + $0x30] sm:$0xff]
  %v303 = vld [vmem:[%s4 + $0x38] sm:$0xff]
  %v304 = vld [vmem:[%s4 + $0x40] sm:$0xff]
  %v305 = vld [vmem:[%s4 + $0x48] sm:$0xff]
  %v306 = vld [vmem:[%s4 + $0x50] sm:$0xff]
  %v307 = vld [vmem:[%s4 + $0x58] sm:$0xff]
  %v308 = vld [vmem:[%s4 + $0x60] sm:$0xff]
  %v309 = vld [vmem:[%s4 + $0x68] sm:$0xff]
  %v310 = vld [vmem:[%s4 + $0x70] sm:$0xff]
  %v311 = vld [vmem:[%s4 + $0x78] sm:$0xff]
  %312 = vmatprep.subr.mxu0 0.0
  %313 = vmatpush1.msra.mxu0 %v311
  %314 = vmatprep.subr.mxu0 0.0
  %315 = vmatpush1.msra.mxu0 %v310
  %316 = vmatprep.subr.mxu0 0.0
  %317 = vmatpush1.msra.mxu0 %v309
  %318 = vmatprep.subr.mxu0 0.0
  %319 = vmatpush1.msra.mxu0 %v308
  %320 = vmatprep.subr.mxu0 0.0
  %321 = vmatpush1.msra.mxu0 %v307
  %322 = vmatprep.subr.mxu0 0.0
  %323 = vmatpush1.msra.mxu0 %v306
  %324 = vmatprep.subr.mxu0 0.0
  %325 = vmatpush1.msra.mxu0 %v305
  %326 = vmatprep.subr.mxu0 0.0
  %327 = vmatpush1.msra.mxu0 %v304
  %328 = vmatprep.subr.mxu0 0.0
  %329 = vmatpush1.msra.mxu0 %v303
  %330 = vmatprep.subr.mxu0 0.0
  %331 = vmatpush1.msra.mxu0 %v302
  %332 = vmatprep.subr.mxu0 0.0
  %333 = vmatpush1.msra.mxu0 %v301
  %334 = vmatprep.subr.mxu0 0.0
  %335 = vmatpush1.msra.mxu0 %v300
  %336 = vmatprep.subr.mxu0 0.0
  %337 = vmatpush1.msra.mxu0 %v299
  %338 = vmatprep.subr.mxu0 0.0
  %339 = vmatpush1.msra.mxu0 %v298
  %340 = vmatprep.subr.mxu0 0.0
  %341 = vmatpush1.msra.mxu0 %v297
  %342 = vmatprep.subr.mxu0 0.0
  %343 = vmatpush1.msra.mxu0 %v296
  %344 = vmatprep.subr.mxu0 0.0
  %345 = vmatpush2.msra.mxu0 0.0
  %346 = vmatprep.subr.mxu0 0.0
  %347 = vmatpush2.msra.mxu0 0.0
  %348 = vmatprep.subr.mxu0 0.0
  %349 = vmatpush2.msra.mxu0 0.0
  %350 = vmatprep.subr.mxu0 0.0
  %351 = vmatpush2.msra.mxu0 0.0
  %352 = vmatprep.subr.mxu0 0.0
  %353 = vmatpush2.msra.mxu0 0.0
  %354 = vmatprep.subr.mxu0 0.0
  %355 = vmatpush2.msra.mxu0 0.0
  %356 = vmatprep.subr.mxu0 0.0
  %357 = vmatpush2.msra.mxu0 0.0
  %358 = vmatprep.subr.mxu0 0.0
  %359 = vmatpush2.msra.mxu0 0.0
  %360 = vmatprep.subr.mxu0 0.0
  %361 = vmatpush2.msra.mxu0 0.0
  %362 = vmatprep.subr.mxu0 0.0
  %363 = vmatpush2.msra.mxu0 0.0
  %364 = vmatprep.subr.mxu0 0.0
  %365 = vmatpush2.msra.mxu0 0.0
  %366 = vmatprep.subr.mxu0 0.0
  %367 = vmatpush2.msra.mxu0 0.0
  %368 = vmatprep.subr.mxu0 0.0
  %369 = vmatpush2.msra.mxu0 0.0
  %370 = vmatprep.subr.mxu0 0.0
  %371 = vmatpush2.msra.mxu0 0.0
  %372 = vmatprep.subr.mxu0 0.0
  %373 = vmatpush2.msra.mxu0 0.0
  %374 = vmatprep.subr.mxu0 0.0
  %375 = vmatpush2.msra.mxu0 0.0
  %376 = vmatprep.mubr.f32.mxu0 0.0
  %377 = vmatmul.mubr.f32.gmra.mxu0 %v295
  %v378 = vpop.f32.mrf.mxu0
  %v379 = vadd.f32 0.0, %v378
  %v380 = vpop.f32.mrf.mxu0
  %381 = vdwg.mxu0
  %v382 = vld [vmem:[%s5] sm:$0xff]
  %v383 = vld [vmem:[%s5 + $0x8] sm:$0xff]
  %v384 = vld [vmem:[%s5 + $0x10] sm:$0xff]
  %v385 = vld [vmem:[%s5 + $0x18] sm:$0xff]
  %v387 = vsel %vm207, %v379, 0
  %389 = vmatprep.subr.mxu0 0.0
  %390 = vmatpush1.msra.mxu0 0.0
  %391 = vmatprep.subr.mxu0 0.0
  %392 = vmatpush1.msra.mxu0 0.0
  %393 = vmatprep.subr.mxu0 0.0
  %394 = vmatpush1.msra.mxu0 0.0
  %395 = vmatprep.subr.mxu0 0.0
  %396 = vmatpush1.msra.mxu0 0.0
  %397 = vmatprep.subr.mxu0 0.0
  %398 = vmatpush1.msra.mxu0 0.0
  %399 = vmatprep.subr.mxu0 0.0
  %400 = vmatpush1.msra.mxu0 0.0
  %401 = vmatprep.subr.mxu0 0.0
  %402 = vmatpush1.msra.mxu0 0.0
  %403 = vmatprep.subr.mxu0 0.0
  %404 = vmatpush1.msra.mxu0 0.0
  %405 = vmatprep.subr.mxu0 0.0
  %406 = vmatpush1.msra.mxu0 0.0
  %407 = vmatprep.subr.mxu0 0.0
  %408 = vmatpush1.msra.mxu0 0.0
  %409 = vmatprep.subr.mxu0 0.0
  %410 = vmatpush1.msra.mxu0 0.0
  %411 = vmatprep.subr.mxu0 0.0
  %412 = vmatpush1.msra.mxu0 0.0
  %413 = vmatprep.subr.mxu0 0.0
  %414 = vmatpush1.msra.mxu0 %v385
  %415 = vmatprep.subr.mxu0 0.0
  %416 = vmatpush1.msra.mxu0 %v384
  %417 = vmatprep.subr.mxu0 0.0
  %418 = vmatpush1.msra.mxu0 %v383
  %419 = vmatprep.subr.mxu0 0.0
  %420 = vmatpush1.msra.mxu0 %v382
  %421 = vmatprep.subr.mxu0 0.0
  %422 = vmatpush2.msra.mxu0 0.0
  %423 = vmatprep.subr.mxu0 0.0
  %424 = vmatpush2.msra.mxu0 0.0
  %425 = vmatprep.subr.mxu0 0.0
  %426 = vmatpush2.msra.mxu0 0.0
  %427 = vmatprep.subr.mxu0 0.0
  %428 = vmatpush2.msra.mxu0 0.0
  %429 = vmatprep.subr.mxu0 0.0
  %430 = vmatpush2.msra.mxu0 0.0
  %431 = vmatprep.subr.mxu0 0.0
  %432 = vmatpush2.msra.mxu0 0.0
  %433 = vmatprep.subr.mxu0 0.0
  %434 = vmatpush2.msra.mxu0 0.0
  %435 = vmatprep.subr.mxu0 0.0
  %436 = vmatpush2.msra.mxu0 0.0
  %437 = vmatprep.subr.mxu0 0.0
  %438 = vmatpush2.msra.mxu0 0.0
  %439 = vmatprep.subr.mxu0 0.0
  %440 = vmatpush2.msra.mxu0 0.0
  %441 = vmatprep.subr.mxu0 0.0
  %442 = vmatpush2.msra.mxu0 0.0
  %443 = vmatprep.subr.mxu0 0.0
  %444 = vmatpush2.msra.mxu0 0.0
  %445 = vmatprep.subr.mxu0 0.0
  %446 = vmatpush2.msra.mxu0 0.0
  %447 = vmatprep.subr.mxu0 0.0
  %448 = vmatpush2.msra.mxu0 0.0
  %449 = vmatprep.subr.mxu0 0.0
  %450 = vmatpush2.msra.mxu0 0.0
  %451 = vmatprep.subr.mxu0 0.0
  %452 = vmatpush2.msra.mxu0 0.0
  %453 = vmatprep.mubr.f32.mxu0 0.0
  %454 = vmatmul.mubr.f32.gmra.mxu0 %v387
  %v455 = vpop.f32.mrf.mxu0
  %v456 = vadd.f32 0.0, %v455
  %v457 = vpop.f32.mrf.mxu0
  %458 = vdwg.mxu0
  %v459 = vmul.f32 %v456, 0.2
  %v460 = vmax.f32 %v456, %v459
  %v461 = vld [vmem:[%s6] sm:$0xff]
  %v462 = vld [vmem:[%s6 + $0x8] sm:$0xff]
  %v463 = vld [vmem:[%s6 + $0x10] sm:$0xff]
  %v464 = vld [vmem:[%s6 + $0x18] sm:$0xff]
  %v465 = vld [vmem:[%s6 + $0x20] sm:$0xff]
  %v466 = vld [vmem:[%s6 + $0x28] sm:$0xff]
  %v467 = vld [vmem:[%s6 + $0x30] sm:$0xff]
  %v468 = vld [vmem:[%s6 + $0x38] sm:$0xff]
  %v469 = vld [vmem:[%s6 + $0x40] sm:$0xff]
  %v470 = vld [vmem:[%s6 + $0x48] sm:$0xff]
  %v471 = vld [vmem:[%s6 + $0x50] sm:$0xff]
  %v472 = vld [vmem:[%s6 + $0x58] sm:$0xff]
  %v473 = vld [vmem:[%s6 + $0x60] sm:$0xff]
  %v474 = vld [vmem:[%s6 + $0x68] sm:$0xff]
  %v475 = vld [vmem:[%s6 + $0x70] sm:$0xff]
  %v476 = vld [vmem:[%s6 + $0x78] sm:$0xff]
  %477 = vmatprep.subr.mxu0 0.0
  %478 = vmatpush1.msra.mxu0 %v476
  %479 = vmatprep.subr.mxu0 0.0
  %480 = vmatpush1.msra.mxu0 %v475
  %481 = vmatprep.subr.mxu0 0.0
  %482 = vmatpush1.msra.mxu0 %v474
  %483 = vmatprep.subr.mxu0 0.0
  %484 = vmatpush1.msra.mxu0 %v473
  %485 = vmatprep.subr.mxu0 0.0
  %486 = vmatpush1.msra.mxu0 %v472
  %487 = vmatprep.subr.mxu0 0.0
  %488 = vmatpush1.msra.mxu0 %v471
  %489 = vmatprep.subr.mxu0 0.0
  %490 = vmatpush1.msra.mxu0 %v470
  %491 = vmatprep.subr.mxu0 0.0
  %492 = vmatpush1.msra.mxu0 %v469
  %493 = vmatprep.subr.mxu0 0.0
  %494 = vmatpush1.msra.mxu0 %v468
  %495 = vmatprep.subr.mxu0 0.0
  %496 = vmatpush1.msra.mxu0 %v467
  %497 = vmatprep.subr.mxu0 0.0
  %498 = vmatpush1.msra.mxu0 %v466
  %499 = vmatprep.subr.mxu0 0.0
  %500 = vmatpush1.msra.mxu0 %v465
  %501 = vmatprep.subr.mxu0 0.0
  %502 = vmatpush1.msra.mxu0 %v464
  %503 = vmatprep.subr.mxu0 0.0
  %504 = vmatpush1.msra.mxu0 %v463
  %505 = vmatprep.subr.mxu0 0.0
  %506 = vmatpush1.msra.mxu0 %v462
  %507 = vmatprep.subr.mxu0 0.0
  %508 = vmatpush1.msra.mxu0 %v461
  %509 = vmatprep.subr.mxu0 0.0
  %510 = vmatpush2.msra.mxu0 0.0
  %511 = vmatprep.subr.mxu0 0.0
  %512 = vmatpush2.msra.mxu0 0.0
  %513 = vmatprep.subr.mxu0 0.0
  %514 = vmatpush2.msra.mxu0 0.0
  %515 = vmatprep.subr.mxu0 0.0
  %516 = vmatpush2.msra.mxu0 0.0
  %517 = vmatprep.subr.mxu0 0.0
  %518 = vmatpush2.msra.mxu0 0.0
  %519 = vmatprep.subr.mxu0 0.0
  %520 = vmatpush2.msra.mxu0 0.0
  %521 = vmatprep.subr.mxu0 0.0
  %522 = vmatpush2.msra.mxu0 0.0
  %523 = vmatprep.subr.mxu0 0.0
  %524 = vmatpush2.msra.mxu0 0.0
  %525 = vmatprep.subr.mxu0 0.0
  %526 = vmatpush2.msra.mxu0 0.0
  %527 = vmatprep.subr.mxu0 0.0
  %528 = vmatpush2.msra.mxu0 0.0
  %529 = vmatprep.subr.mxu0 0.0
  %530 = vmatpush2.msra.mxu0 0.0
  %531 = vmatprep.subr.mxu0 0.0
  %532 = vmatpush2.msra.mxu0 0.0
  %533 = vmatprep.subr.mxu0 0.0
  %534 = vmatpush2.msra.mxu0 0.0
  %535 = vmatprep.subr.mxu0 0.0
  %536 = vmatpush2.msra.mxu0 0.0
  %537 = vmatprep.subr.mxu0 0.0
  %538 = vmatpush2.msra.mxu0 0.0
  %539 = vmatprep.subr.mxu0 0.0
  %540 = vmatpush2.msra.mxu0 0.0
  %541 = vmatprep.mubr.f32.mxu0 0.0
  %542 = vmatmul.mubr.f32.gmra.mxu0 %v460
  %v543 = vpop.f32.mrf.mxu0
  %v544 = vadd.f32 0.0, %v543
  %v545 = vpop.f32.mrf.mxu0
  %546 = vdwg.mxu0
  %548 = vrot.lane.b32.xlu0 %v196, 64
  %v549 = vpop.permute.xlu0 %548
  %v551 = vsel %vm220, %v544, %v549
  %552 = vst [vmem:[%s7] sm:$0xff] %v551
  %553 = vst.msk [vmem:[%s7 + $0x8] sm:$0xff] %vm207, %v379
  // Predicated region
  $region30: #{mcm_forward.1} parent=0 // pred_check
    _
  $region31: #{mcm_forward.1} parent=0 // pred_check_branch
    %555 = sbr.rel (0) target = $region33
  $region32: #{mcm_forward.1} parent=0 // pred_region
    _
  $region33: #{mcm_forward.1} parent=0 // pred_fallthru
    _
  // Predicated region
  $region34: #{mcm_forward.1} parent=0 // pred_check
    _
  $region35: #{mcm_forward.1} parent=0 // pred_check_branch
    %557 = sbr.rel (0) target = $region37
  $region36: #{mcm_forward.1} parent=0 // pred_region
    _
  $region37: #{mcm_forward.1} parent=0 // pred_fallthru
    _

</llo_original>
